<compile_context>
chip_gen: v7x
topology: tpu7x:2x2x1
jax: 0.10.0
libtpu: 0.0.40
codegen_flags: <defaults>
</compile_context>

<pallas_src>
import jax
import jax.numpy as jnp
from jax.experimental import pallas as pl
from jax.experimental.pallas import tpu as pltpu


# ----------------------------------------------------------------------------
# Kernel
# ----------------------------------------------------------------------------
def _masked_mean_pool_kernel(h_ref, m_ref, inv_ref, o_ref):
    """One (bB, 1, bH) output tile, accumulated in-place over S blocks (axis 2).

    h_ref:   (bB, bS, bH)  hidden-state tile (storage dtype, e.g. bf16)
    m_ref:   (bB, 1,  bS)  attention-mask tile, already in h's dtype (0/1)
    inv_ref: (bB, 1,  1)   precomputed 1 / max(len, 1), float32
    o_ref:   (bB, 1,  bH)  pooled output tile, float32 (doubles as accumulator)
    """
    k = pl.program_id(2)

    # Masked partial sum over this S chunk on the MXU:
    #   (bB, 1, bS) @ (bB, bS, bH) -> (bB, 1, bH), f32 accumulate.
    partial = jnp.einsum(
        "bqs,bsh->bqh", m_ref[...], h_ref[...],
        preferred_element_type=jnp.float32)

    @pl.when(k == 0)
    def _init():
        o_ref[...] = partial

    @pl.when(k != 0)
    def _accumulate():
        o_ref[...] += partial

    @pl.when(k == pl.num_programs(2) - 1)
    def _finalize():
        o_ref[...] = o_ref[...] * inv_ref[...]


# ----------------------------------------------------------------------------
# Tiling helpers
# ----------------------------------------------------------------------------
def _vmem_capacity_bytes(default=64 << 20):
    """Physical VMEM per TensorCore; conservative 64 MiB (v7x) fallback."""
    try:
        info = pltpu.get_tpu_info()
        cap = getattr(info, "vmem_capacity_bytes", None)
        if cap:
            return int(cap)
    except Exception:
        pass
    return default


def _pick_tile(dim, candidates):
    for c in candidates:
        if c <= dim and dim % c == 0:
            return c
    return dim  # full extent: always a legal block shape


def _select_tiles(B, S, H, itemsize, block_b, block_s, block_h, vmem_cap):
    # Per-copy budget for the h tile; double-buffered it uses ~2/5 of VMEM,
    # leaving headroom for mask/inv/output buffers and compiler scratch.
    h_tile_budget = vmem_cap // 5

    # --- hidden blocking: prefer full H (contiguous HBM rows) -----------------
    if block_h is not None:
        bH = block_h
    elif H <= 128 or 8 * 128 * H * itemsize <= h_tile_budget:
        bH = H
    else:
        bH = _pick_tile(H, (512, 256, 128))   # lane-dense fallbacks only

    # --- sequence blocking: largest candidate that fits with a minimal bB -----
    if block_s is not None:
        bS = block_s
    else:
        bS = None
        for c in (1024, 512, 256, 128):
            if c <= S and S % c == 0 and 8 * c * bH * itemsize <= h_tile_budget:
                bS = c
                break
        if bS is None:
            bS = _pick_tile(S, (1024, 512, 256, 128))

    # --- batch blocking: as large as the budget allows -----------------------
    if block_b is not None:
        bB = block_b
    else:
        bB = None
        for c in (B, 64, 32, 16, 8):
            if c <= B and B % c == 0 and c * bS * bH * itemsize <= h_tile_budget:
                bB = c
                break
        if bB is None:
            bB = _pick_tile(B, (8, 4, 2, 1))

    # --- v7x: keep both TensorCores busy (>= 2 blocks on the parallel axes) ---
    if block_b is None and block_h is None and (B // bB) * (H // bH) == 1:
        if B >= 2 and B % 2 == 0:
            bB = B // 2
        elif H % 256 == 0:
            bH = H // 2

    return bB, bS, bH


# ----------------------------------------------------------------------------
# Wrapper
# ----------------------------------------------------------------------------
def cot_encoder_pool(h, attention_mask, pool="mean", *,
                     block_b=None, block_s=None, block_h=None,
                     min_pallas_bytes=1 << 16):
    """Pallas equivalent of CotEncoder.forward's pooling stage.

    h:              (B, S, H) last_hidden_state (bf16 or f32)
    attention_mask: (B, S) 0/1 mask (int or float)
    returns:        (B, H) float32
    """
    B, S, H = h.shape

    if pool != "mean":
        # 'cls' pooling is a cheap slice; leave it to XLA.
        return h[:, 0].astype(jnp.float32)

    # NOTE: max(den, 1) guards fully-masked rows (yields 0s instead of NaN).
    den = jnp.maximum(attention_mask.sum(axis=1, keepdims=True), 1)  # (B, 1)

    if h.size * h.dtype.itemsize < min_pallas_bytes:
        # Toy sizes: kernel launch/step overhead dwarfs the data movement.
        num = (h.astype(jnp.float32)
               * attention_mask.astype(jnp.float32)[..., None]).sum(1)
        return num / den.astype(jnp.float32)

    itemsize = h.dtype.itemsize
    vmem_cap = _vmem_capacity_bytes()
    bB, bS, bH = _select_tiles(B, S, H, itemsize,
                               block_b, block_s, block_h, vmem_cap)
    assert B % bB == 0 and S % bS == 0 and H % bH == 0, (B, S, H, bB, bS, bH)

    # Mask as (B, 1, S) in h's dtype (0/1 values are exact in bf16);
    # reciprocal lengths stay f32.
    m3 = attention_mask.reshape(B, 1, S).astype(h.dtype)
    inv3 = (1.0 / den.astype(jnp.float32)).reshape(B, 1, 1)

    # VMEM working set (double-buffered inputs + output; no extra scratch).
    # Sub-8 sublane dims pad to 8; lane dims already multiples of 128 / full.
    h_bytes = bB * bS * bH * itemsize
    m_bytes = bB * 8 * bS * m3.dtype.itemsize
    inv_bytes = bB * 8 * 128 * 4
    o_bytes = bB * 8 * bH * 4
    need = 2 * (h_bytes + m_bytes + inv_bytes + o_bytes)
    vmem_limit = int(min(0.8 * vmem_cap, max(32 << 20, 1.3 * need)))

    grid = (B // bB, H // bH, S // bS)   # reduction axis (S) last
    out = pl.pallas_call(
        _masked_mean_pool_kernel,
        out_shape=jax.ShapeDtypeStruct((B, 1, H), jnp.float32),
        grid=grid,
        in_specs=[
            pl.BlockSpec((bB, bS, bH), lambda i, j, k: (i, k, j)),
            pl.BlockSpec((bB, 1, bS), lambda i, j, k: (i, 0, k)),
            pl.BlockSpec((bB, 1, 1), lambda i, j, k: (i, 0, 0)),
        ],
        out_specs=pl.BlockSpec((bB, 1, bH), lambda i, j, k: (i, 0, j)),
        compiler_params=pltpu.CompilerParams(
            dimension_semantics=("parallel", "parallel", "arbitrary"),
            vmem_limit_bytes=vmem_limit,
        ),
    )(h, m3, inv3)
    return out.reshape(B, H)


def tiny_backbone(input_ids, embed, proj):
    """Deterministic stand-in for the HF backbone's last_hidden_state.

    # TODO(synk): the real HF transformer backbone has no clean single-kernel
    # Pallas equivalent; replaced with embedding lookup + linear + tanh (bf16 out).
    """
    x = embed[input_ids]                        # (B, S, H)
    return jnp.tanh(x @ proj).astype(jnp.bfloat16)


if __name__ == "__main__":
    B, S, H, V = 8, 256, 256, 128

    key = jax.random.PRNGKey(0)
    k_ids, k_emb, k_proj = jax.random.split(key, 3)

    # Deterministic example inputs (varying valid lengths per row).
    input_ids = jax.random.randint(k_ids, (B, S), 0, V, dtype=jnp.int32)
    lengths = jnp.array([S, 200, 128, 64, 10, S, 1, 97], dtype=jnp.int32)
    attention_mask = (jnp.arange(S)[None, :] < lengths[:, None]).astype(jnp.int32)

    # Deterministic "backbone" parameters.
    embed = 0.02 * jax.random.normal(k_emb, (V, H), dtype=jnp.float32)
    proj = 0.05 * jax.random.normal(k_proj, (H, H), dtype=jnp.float32)

    # Forward: backbone (glue) -> masked mean pool (Pallas kernel).
    h = tiny_backbone(input_ids, embed, proj)               # (B, S, H) bf16

    # Reference: mirrors the PyTorch forward (in f32, from the same bf16 h).
    hf = h.astype(jnp.float32)
    mf = attention_mask.astype(jnp.float32)
    num = (hf * mf[..., None]).sum(1)
    den = jnp.maximum(attention_mask.sum(1, keepdims=True), 1).astype(jnp.float32)
    ref = num / den

    # (a) Explicit small blocks so the demo exercises the full grid
    #     (2 B-blocks x 2 H-blocks x 2 S reduction steps) and the in-place
    #     output accumulation path.
    out_small = cot_encoder_pool(h, attention_mask, pool="mean",
                                 block_b=4, block_s=128, block_h=128)
    out_small = jax.block_until_ready(out_small)

    # (b) Auto tiling (production path: full-H contiguous blocks, >=2 parallel
    #     blocks, generation-aware VMEM limit).
    out_auto = cot_encoder_pool(h, attention_mask, pool="mean")
    out_auto = jax.block_until_ready(out_auto)

    for out in (out_small, out_auto):
        assert out.shape == (B, H) and out.dtype == jnp.float32
        max_err = float(jnp.max(jnp.abs(out - ref)))
        assert jnp.allclose(out, ref, atol=1e-4, rtol=1e-4), f"max_abs_err={max_err}"

    print("KERNEL_OK")
</pallas_src>

<mosaic_0001>
module attributes {stable_mosaic.version = 11 : i64} {
  func.func @_masked_mean_pool_kernel(%arg0: i32, %arg1: i32, %arg2: i32, %arg3: memref<4x128x128xbf16, #tpu.memory_space<vmem>>, %arg4: memref<4x1x128xbf16, #tpu.memory_space<vmem>>, %arg5: memref<4x1x1xf32, #tpu.memory_space<vmem>>, %arg6: memref<4x1x128xf32, #tpu.memory_space<vmem>>) attributes {dimension_semantics = [#tpu.dimension_semantics<parallel>, #tpu.dimension_semantics<parallel>, #tpu.dimension_semantics<arbitrary>], iteration_bounds = array<i64: 2, 2, 2>, scalar_prefetch = 0 : i64, scratch_operands = 0 : i64, tpu.core_type = #tpu.core_type<tc>, window_params = [{transform_indices = @transform_0, window_bounds = array<i64: 4, 128, 128>}, {transform_indices = @transform_1, window_bounds = array<i64: 4, 1, 128>}, {transform_indices = @transform_2, window_bounds = array<i64: 4, 1, 1>}, {transform_indices = @transform_3, window_bounds = array<i64: 4, 1, 128>}]} {
    %c0 = arith.constant 0 : index
    %c0_0 = arith.constant 0 : index
    %c0_1 = arith.constant 0 : index
    %0 = vector.load %arg4[%c0, %c0_0, %c0_1] : memref<4x1x128xbf16, #tpu.memory_space<vmem>>, vector<4x1x128xbf16>
    %c0_2 = arith.constant 0 : index
    %c0_3 = arith.constant 0 : index
    %c0_4 = arith.constant 0 : index
    %1 = vector.load %arg3[%c0_2, %c0_3, %c0_4] : memref<4x128x128xbf16, #tpu.memory_space<vmem>>, vector<4x128x128xbf16>
    "tpu.trace_start"() <{level = 10 : i32, message = "bqs,bsh->bqh"}> : () -> ()
    %cst = arith.constant dense<0.000000e+00> : vector<4x1x128xf32>
    %2 = tpu.matmul %0, %1, %cst {dimension_numbers = #tpu.dot_dimension_numbers<[2], [1], [1], [2], [0, 0, 0, 1, 1, 2], [0], [0]>} : vector<4x1x128xbf16>, vector<4x128x128xbf16>, vector<4x1x128xf32> -> vector<4x1x128xf32>
    %c0_i32 = arith.constant 0 : i32
    "tpu.trace_stop"() : () -> ()
    %3 = arith.cmpi eq, %arg2, %c0_i32 : i32
    %4 = arith.extui %3 : i1 to i32
    %c0_i32_5 = arith.constant 0 : i32
    %5 = arith.cmpi ne, %4, %c0_i32_5 : i32
    scf.if %5 {
      %c0_9 = arith.constant 0 : index
      %c0_10 = arith.constant 0 : index
      %c0_11 = arith.constant 0 : index
      %12 = vector.load %arg6[%c0_9, %c0_10, %c0_11] : memref<4x1x128xf32, #tpu.memory_space<vmem>>, vector<4x1x128xf32>
      tpu.vector_store %arg6[%c0_9, %c0_10, %c0_11], %2 {strides = array<i32>} : memref<4x1x128xf32, #tpu.memory_space<vmem>>, vector<4x1x128xf32>,
    } else {
    }
    %c0_i32_6 = arith.constant 0 : i32
    %6 = arith.cmpi ne, %arg2, %c0_i32_6 : i32
    %7 = arith.extui %6 : i1 to i32
    %c0_i32_7 = arith.constant 0 : i32
    %8 = arith.cmpi ne, %7, %c0_i32_7 : i32
    scf.if %8 {
      %c0_9 = arith.constant 0 : index
      %c0_10 = arith.constant 0 : index
      %c0_11 = arith.constant 0 : index
      %12 = vector.load %arg6[%c0_9, %c0_10, %c0_11] : memref<4x1x128xf32, #tpu.memory_space<vmem>>, vector<4x1x128xf32>
      %13 = arith.addf %12, %2 : vector<4x1x128xf32>
      %c0_12 = arith.constant 0 : index
      %c0_13 = arith.constant 0 : index
      %c0_14 = arith.constant 0 : index
      %14 = vector.load %arg6[%c0_12, %c0_13, %c0_14] : memref<4x1x128xf32, #tpu.memory_space<vmem>>, vector<4x1x128xf32>
      tpu.vector_store %arg6[%c0_12, %c0_13, %c0_14], %13 {strides = array<i32>} : memref<4x1x128xf32, #tpu.memory_space<vmem>>, vector<4x1x128xf32>,
    } else {
    }
    %c1_i32 = arith.constant 1 : i32
    %9 = arith.cmpi eq, %arg2, %c1_i32 : i32
    %10 = arith.extui %9 : i1 to i32
    %c0_i32_8 = arith.constant 0 : i32
    %11 = arith.cmpi ne, %10, %c0_i32_8 : i32
    scf.if %11 {
      %c0_9 = arith.constant 0 : index
      %c0_10 = arith.constant 0 : index
      %c0_11 = arith.constant 0 : index
      %12 = vector.load %arg6[%c0_9, %c0_10, %c0_11] : memref<4x1x128xf32, #tpu.memory_space<vmem>>, vector<4x1x128xf32>
      %c0_12 = arith.constant 0 : index
      %c0_13 = arith.constant 0 : index
      %c0_14 = arith.constant 0 : index
      %13 = vector.load %arg5[%c0_12, %c0_13, %c0_14] : memref<4x1x1xf32, #tpu.memory_space<vmem>>, vector<4x1x1xf32>
      %14 = vector.broadcast %13 : vector<4x1x1xf32> to vector<4x1x128xf32>
      %15 = arith.mulf %12, %14 : vector<4x1x128xf32>
      %c0_15 = arith.constant 0 : index
      %c0_16 = arith.constant 0 : index
      %c0_17 = arith.constant 0 : index
      %16 = vector.load %arg6[%c0_15, %c0_16, %c0_17] : memref<4x1x128xf32, #tpu.memory_space<vmem>>, vector<4x1x128xf32>
      tpu.vector_store %arg6[%c0_15, %c0_16, %c0_17], %15 {strides = array<i32>} : memref<4x1x128xf32, #tpu.memory_space<vmem>>, vector<4x1x128xf32>,
    } else {
    }
    return
  }
  func.func @transform_0(%arg0: i32, %arg1: i32, %arg2: i32) -> (i32, i32, i32) {
    %c0_i32 = arith.constant 0 : i32
    return %arg0, %arg2, %arg1 : i32, i32, i32
  }
  func.func @transform_1(%arg0: i32, %arg1: i32, %arg2: i32) -> (i32, i32, i32) {
    %c0_i32 = arith.constant 0 : i32
    %c0_i32_0 = arith.constant 0 : i32
    return %arg0, %c0_i32, %arg2 : i32, i32, i32
  }
  func.func @transform_2(%arg0: i32, %arg1: i32, %arg2: i32) -> (i32, i32, i32) {
    %c0_i32 = arith.constant 0 : i32
    %c0_i32_0 = arith.constant 0 : i32
    %c0_i32_1 = arith.constant 0 : i32
    return %arg0, %c0_i32, %c0_i32_0 : i32, i32, i32
  }
  func.func @transform_3(%arg0: i32, %arg1: i32, %arg2: i32) -> (i32, i32, i32) {
    %c0_i32 = arith.constant 0 : i32
    %c0_i32_0 = arith.constant 0 : i32
    return %arg0, %c0_i32, %arg1 : i32, i32, i32
  }
}

</mosaic_0001>

<llo_original>
// kernel: tpu_custom_call.1
$region0: #{tpu_custom_call.1}
  #allocation0 [shape = 'u32[]', space=smem, size = 0x4, offset = 0x4, fixed_abs, tag = 'smem constant byte address 0x4 - core index']
  #allocation1 [shape = 'u32[144,128]{1,0:T(1,128)}', space=vmem, size = 0x12000, scoped, tag = 'internal scratch']
  #allocation7 [shape = 's32[]', space=sflag, size = 0x4, offset = 0, fixed_abs, tag = 'sflag constant byte address 0x0 - dummy sync flag']
  %s0 = inlined_call_operand.hbm [shape: bf16[8,256,256], index: 0, kind: input, shape index: {}]
  %s1 = inlined_call_operand.vmem [shape: bf16[8,1,256], index: 1, kind: input, shape index: {}]
  %s2 = inlined_call_operand.vmem [shape: f32[8,1,1], index: 2, kind: input, shape index: {}]
  %s3 = inlined_call_operand.hbm [shape: f32[8,1,256], index: 3, kind: output, shape index: {}]
  %s4 = sld [smem:[#allocation0]]
  $region95: #{tpu_custom_call.1} parent=0
    _
  %s6 = ssub.s32 1, %s4
  %s7 = scalar_select 0, %s6, %s4
  $region1: #{tpu_custom_call.1} parent=0
    #allocation2 [shape = 'u8[262144]{0}', space=vmem, size = 0x40000, scoped, tag = 'input window, operand 0']
    #allocation3 [shape = 's32[2]{0}', space=sflag, size = 0x8, scoped, tag = 'scoped memory for tpu_custom_call.1']
    #allocation4 [shape = 's32[2]{0}', space=sflag, size = 0x8, scoped, tag = 'scoped memory for tpu_custom_call.1']
    #allocation5 [shape = 'u8[4096]{0}', space=vmem, size = 0x1000, scoped, tag = 'input window, operand 1']
    #allocation6 [shape = 'u8[4096]{0}', space=vmem, size = 0x1000, scoped, tag = 'output window, operand 0']
    %8 = vsyncpa [#allocation3], 0
    %s9 = scalar_lea.sflag [#allocation3], 1
    %10 = vsyncpa %s9, 0
    %11 = vsyncpa [#allocation4], 0
    %s12 = scalar_lea.sflag [#allocation4], 1
    %13 = vsyncpa %s12, 0
    loop: start=0, step=1, limit=10
    $region2: #{tpu_custom_call.1} parent=1 // loop_pre_header
      _
    $region3: #{tpu_custom_call.1} parent=1 // loop_header
      %s15 = sphi 0, %s19
      %p16 = scmp.ge.s32.totalorder %s15, 10
      %s22 = sphi 0, %s41
      %s23 = sphi 0, %s37
      %s24 = sphi 0, %s33
      %s25 = sphi 0, %s22
      %s26 = sphi 0, %s23
      %s27 = sphi 0, %s24
      %s28 = sphi 0, %s25
      %s29 = sphi 0, %s26
      %s30 = sphi 0, %s27
      %s48 = sphi 0, %s50
      %s51 = sphi 0, %s48
      %s52 = sphi 0, %s51
      %s68 = sphi 0, %s52
      %s76 = sphi 0, %s78
      %s79 = sphi 0, %s76
      %s80 = sphi 0, %s79
      %s96 = sphi 0, %s80
      %s102 = sphi 0, %s104
      %s105 = sphi 0, %s102
      %s106 = sphi 0, %s105
      %s122 = sphi 0, %s106
      %s130 = sphi 0, %s132
      %s133 = sphi 0, %s130
      %s134 = sphi 0, %s133
      %s150 = sphi 0, %s134
    $region4: #{tpu_custom_call.1} parent=1 // loop_header_branch
      %18 = sbr.rel (%p16) target = $region8
    $region5: #{tpu_custom_call.1} parent=1 // loop_body
      %s20 = ssub.s32 %s15, 1
      %s21 = ssub.s32 %s15, 2
      %s31 = sadd.s32 1, %s24
      %p32 = scmp.ge.s32.totalorder %s31, 2
      %s33 = scalar_select %p32, 0, %s31
      %s34 = sadd.s32 1, %s23
      %s35 = scalar_select %p32, %s34, %s23
      %p36 = scmp.ge.s32.totalorder %s35, 2
      %s37 = scalar_select %p36, 0, %s35
      %s38 = sadd.s32 1, %s22
      %s39 = scalar_select %p36, %s38, %s22
      %p40 = scmp.ge.s32.totalorder %s39, 2
      %s41 = scalar_select %p40, 0, %s39
      %s42 = ssub.s32 %s22, %s41
      %s43 = ssub.s32 %s24, %s33
      %s44 = sor.u32 %s42, %s43
      %s45 = ssub.s32 %s23, %s37
      %s46 = sor.u32 %s44, %s45
      %p47 = scmp.eq.s32.totalorder %s46, 0
      %s49 = sadd.s32 %s48, 1
      %s50 = scalar_select %p47, %s48, %s49
      %p53 = pneg %p47
      %p54 = scmp.eq.s32.totalorder %s15, 7
      %p55 = por %p53, %p54
      %p56 = scmp.ne.s32.totalorder %s48, %s51
      %p57 = scmp.eq.s32.totalorder %s15, 0
      %p58 = por %p56, %p57
      %p59 = scmp.ne.s32.totalorder %s48, %s51
      %p60 = scmp.eq.s32.totalorder %s20, 7
      %p61 = por %p59, %p60
      %p62 = scmp.ne.s32.totalorder %s51, %s52
      %p63 = scmp.eq.s32.totalorder %s20, 0
      %p64 = por %p62, %p63
      %p65 = scmp.ne.s32.totalorder %s51, %s52
      %p66 = scmp.eq.s32.totalorder %s21, 7
      %p67 = por %p65, %p66
      %p69 = scmp.ne.s32.totalorder %s52, %s68
      %p70 = scmp.eq.s32.totalorder %s21, 0
      %p71 = por %p69, %p70
      %s72 = ssub.s32 %s22, %s41
      %s73 = ssub.s32 %s24, %s33
      %s74 = sor.u32 %s72, %s73
      %p75 = scmp.eq.s32.totalorder %s74, 0
      %s77 = sadd.s32 %s76, 1
      %s78 = scalar_select %p75, %s76, %s77
      %p81 = pneg %p75
      %p82 = scmp.eq.s32.totalorder %s15, 7
      %p83 = por %p81, %p82
      %p84 = scmp.ne.s32.totalorder %s76, %s79
      %p85 = scmp.eq.s32.totalorder %s15, 0
      %p86 = por %p84, %p85
      %p87 = scmp.ne.s32.totalorder %s76, %s79
      %p88 = scmp.eq.s32.totalorder %s20, 7
      %p89 = por %p87, %p88
      %p90 = scmp.ne.s32.totalorder %s79, %s80
      %p91 = scmp.eq.s32.totalorder %s20, 0
      %p92 = por %p90, %p91
      %p93 = scmp.ne.s32.totalorder %s79, %s80
      %p94 = scmp.eq.s32.totalorder %s21, 7
      %p95 = por %p93, %p94
      %p97 = scmp.ne.s32.totalorder %s80, %s96
      %p98 = scmp.eq.s32.totalorder %s21, 0
      %p99 = por %p97, %p98
      %s100 = ssub.s32 %s22, %s41
      %p101 = scmp.eq.s32.totalorder %s100, 0
      %s103 = sadd.s32 %s102, 1
      %s104 = scalar_select %p101, %s102, %s103
      %p107 = pneg %p101
      %p108 = scmp.eq.s32.totalorder %s15, 7
      %p109 = por %p107, %p108
      %p110 = scmp.ne.s32.totalorder %s102, %s105
      %p111 = scmp.eq.s32.totalorder %s15, 0
      %p112 = por %p110, %p111
      %p113 = scmp.ne.s32.totalorder %s102, %s105
      %p114 = scmp.eq.s32.totalorder %s20, 7
      %p115 = por %p113, %p114
      %p116 = scmp.ne.s32.totalorder %s105, %s106
      %p117 = scmp.eq.s32.totalorder %s20, 0
      %p118 = por %p116, %p117
      %p119 = scmp.ne.s32.totalorder %s105, %s106
      %p120 = scmp.eq.s32.totalorder %s21, 7
      %p121 = por %p119, %p120
      %p123 = scmp.ne.s32.totalorder %s106, %s122
      %p124 = scmp.eq.s32.totalorder %s21, 0
      %p125 = por %p123, %p124
      %s126 = ssub.s32 %s22, %s41
      %s127 = ssub.s32 %s23, %s37
      %s128 = sor.u32 %s126, %s127
      %p129 = scmp.eq.s32.totalorder %s128, 0
      %s131 = sadd.s32 %s130, 1
      %s132 = scalar_select %p129, %s130, %s131
      %p135 = pneg %p129
      %p136 = scmp.eq.s32.totalorder %s15, 7
      %p137 = por %p135, %p136
      %p138 = scmp.ne.s32.totalorder %s130, %s133
      %p139 = scmp.eq.s32.totalorder %s15, 0
      %p140 = por %p138, %p139
      %p141 = scmp.ne.s32.totalorder %s130, %s133
      %p142 = scmp.eq.s32.totalorder %s20, 7
      %p143 = por %p141, %p142
      %p144 = scmp.ne.s32.totalorder %s133, %s134
      %p145 = scmp.eq.s32.totalorder %s20, 0
      %p146 = por %p144, %p145
      %p147 = scmp.ne.s32.totalorder %s133, %s134
      %p148 = scmp.eq.s32.totalorder %s21, 7
      %p149 = por %p147, %p148
      %p151 = scmp.ne.s32.totalorder %s134, %s150
      %p152 = scmp.eq.s32.totalorder %s21, 0
      %p153 = por %p151, %p152
      %p154 = scmp.le.s32.totalorder 1, %s15
      %p155 = scmp.lt.s32.totalorder %s15, 9
      %p156 = pnand %p154, %p155
      %p157 = pneg %p156
      // Predicated region
      $region9: #{tpu_custom_call.1} parent=5 // pred_check
        _
      $region10: #{tpu_custom_call.1} parent=5 // pred_check_branch
        %159 = sbr.rel (%p156) target = $region12
      $region11: #{tpu_custom_call.1} parent=5 // pred_region
        %s160 = ssub.s32 %s15, 1
      $region12: #{tpu_custom_call.1} parent=5 // pred_fallthru
        _
      %p161 = scmp.lt.s32.totalorder %s15, 8
      // Predicated region
      $region13: #{tpu_custom_call.1} parent=5 // pred_check
        %p162 = pneg %p161
      $region14: #{tpu_custom_call.1} parent=5 // pred_check_branch
        %164 = sbr.rel (%p162) target = $region16
      $region15: #{tpu_custom_call.1} parent=5 // pred_region
        // Predicated region
        $region17: #{tpu_custom_call.1} parent=15 // pred_check
          %p165 = pneg %p58
        $region18: #{tpu_custom_call.1} parent=15 // pred_check_branch
          %167 = sbr.rel (%p165) target = $region20
        $region19: #{tpu_custom_call.1} parent=15 // pred_region
          #allocation8 [shape = 'u32[6]{0}', space=smem, size = 0x18, scoped, tag = 'DMA stride descriptor']
          %s168 = sand.u32 %s48, 1
          %s169 = scalar_lea.sflag [#allocation3], %s168
          %s170 = sand.u32 %s48, 1
          %s171 = smul.addr %s170, 256
          %s172 = scalar_lea.vmem [#allocation2], %s171
          %s173 = smul.u32 4, %s22
          %s174 = smul.u32 16, %s24
          %s176 = ssub.s32 4096, 4096
          %177 = vsyncadd %s169, %s176
          %s178 = smul.addr %s174, 2
          %s179 = sadd.s32 %s23, %s178
          %s180 = smul.addr %s173, 64
          %s181 = sadd.s32 %s179, %s180
          %s182 = smul.addr %s181, 64
          %s183 = scalar_lea.hbm %s0, %s182
          %s185 = sshll.u32 1, 14
          %s186 = sxor.u32 4294967295, %s185
          %s188 = sld [smem:[#allocation0]]
          %s189 = sadd.s32 2, %s188
          %s191 = sshll.u32 7, 26
          %s192 = sxor.u32 4294967295, %s191
          %s193 = sand.u32 0, %s192
          %s194 = sshll.u32 %s189, 26
          %s195 = sor.u32 %s193, %s194
          %s196 = sshll.u32 %s172, 4
          %s197 = int_to_ptr.vmem [resolvable:$true] %s196
          %203 = sst [smem:[#allocation8]] 4096
          %s204 = scalar_lea.smem [#allocation8], 1
          %205 = sst [smem:[%s204]] 1024
          %s206 = scalar_lea.smem [#allocation8], 2
          %207 = sst [smem:[%s206]] 16
          %s208 = scalar_lea.smem [#allocation8], 3
          %209 = sst [smem:[%s208]] 128
          %s210 = scalar_lea.smem [#allocation8], 4
          %211 = sst [smem:[%s210]] 64
          %s212 = scalar_lea.smem [#allocation8], 5
          %213 = sst [smem:[%s212]] 4
          %215 = dma.general %s183, 4096, %s197, %s169, [#allocation7], [#allocation8], %s195, 0
        $region20: #{tpu_custom_call.1} parent=15 // pred_fallthru
          _
        // Predicated region
        $region21: #{tpu_custom_call.1} parent=15 // pred_check
          %p216 = pneg %p86
        $region22: #{tpu_custom_call.1} parent=15 // pred_check_branch
          %218 = sbr.rel (%p216) target = $region24
        $region23: #{tpu_custom_call.1} parent=15 // pred_region
          %s219 = sand.u32 %s76, 1
          %s220 = sand.u32 %s76, 1
          %s221 = smul.addr %s220, 4
          %s222 = scalar_lea.vmem [#allocation5], %s221
          %s223 = smul.u32 4, %s22
          %s224 = smul.addr %s223, 2
          %s225 = sadd.s32 %s24, %s224
          %s226 = scalar_lea.vmem %s1, %s225
          // Predicated region
          $region25: #{tpu_custom_call.1} parent=23 // pred_check
            _
          $region26: #{tpu_custom_call.1} parent=23 // pred_check_branch
            %228 = sbr.rel (0) target = $region28
          $region27: #{tpu_custom_call.1} parent=23 // pred_region
            // Predicated region
            $region29: #{tpu_custom_call.1} parent=27 // pred_check
              _
            $region30: #{tpu_custom_call.1} parent=27 // pred_check_branch
              %230 = sbr.rel target = $region32
            $region31: #{tpu_custom_call.1} parent=27 // pred_region
              // Predicated region
              $region44: #{tpu_custom_call.1} parent=31 // pred_check
                _
              $region45: #{tpu_custom_call.1} parent=31 // pred_check_branch
                %251 = sbr.rel (0) target = $region47
              $region46: #{tpu_custom_call.1} parent=31 // pred_region
                loop: start=0, step=1, limit=1
                $region48: #{tpu_custom_call.1} parent=46 // loop_pre_header
                  _
                $region49: #{tpu_custom_call.1} parent=46 // loop_header
                  %s254 = sphi 0, %s258
                  %p255 = scmp.ge.s32.totalorder %s254, 1
                  %s259 = sphi %s226, %s226
                  %s260 = sphi %s222, %s222
                $region50: #{tpu_custom_call.1} parent=46 // loop_header_branch
                  %257 = sbr.rel (%p255) target = $region54
                $region51: #{tpu_custom_call.1} parent=46 // loop_body
                  %v261 = vld [vmem:[%s259] sm:$0x1]
                  %262 = vst [vmem:[%s260] sm:$0x1] %v261
                  %v263 = vld [vmem:[%s259 + $0x2] sm:$0x1]
                  %264 = vst [vmem:[%s260 + $0x1] sm:$0x1] %v263
                  %v265 = vld [vmem:[%s259 + $0x4] sm:$0x1]
                  %266 = vst [vmem:[%s260 + $0x2] sm:$0x1] %v265
                  %v267 = vld [vmem:[%s259 + $0x6] sm:$0x1]
                  %268 = vst [vmem:[%s260 + $0x3] sm:$0x1] %v267
                $region52: #{tpu_custom_call.1} parent=46 // loop_footer
                  %s258 = sadd.s32 1, %s254
                $region53: #{tpu_custom_call.1} parent=46 // loop_footer_branch
                  %253 = sbr.rel target = $region49
                $region54: #{tpu_custom_call.1} parent=46 // loop_exit
                  _
              $region47: #{tpu_custom_call.1} parent=31 // pred_fallthru
                _
            $region32: #{tpu_custom_call.1} parent=27 // pred_fallthru
              _
            // Predicated region
            $region33: #{tpu_custom_call.1} parent=27 // pred_check
              _
            $region34: #{tpu_custom_call.1} parent=27 // pred_check_branch
              %232 = sbr.rel (0) target = $region36
            $region35: #{tpu_custom_call.1} parent=27 // pred_region
              loop: start=0, step=1, limit=1
              $region37: #{tpu_custom_call.1} parent=35 // loop_pre_header
                _
              $region38: #{tpu_custom_call.1} parent=35 // loop_header
                %s235 = sphi 0, %s239
                %p236 = scmp.ge.s32.totalorder %s235, 1
                %s240 = sphi %s226, %s226
                %s241 = sphi %s222, %s222
              $region39: #{tpu_custom_call.1} parent=35 // loop_header_branch
                %238 = sbr.rel (%p236) target = $region43
              $region40: #{tpu_custom_call.1} parent=35 // loop_body
                %v242 = vld [vmem:[%s240] sm:$0x1]
                %243 = vst [vmem:[%s241] sm:$0x1] %v242
                %v244 = vld [vmem:[%s240 + $0x2] sm:$0x1]
                %245 = vst [vmem:[%s241 + $0x1] sm:$0x1] %v244
                %v246 = vld [vmem:[%s240 + $0x4] sm:$0x1]
                %247 = vst [vmem:[%s241 + $0x2] sm:$0x1] %v246
                %v248 = vld [vmem:[%s240 + $0x6] sm:$0x1]
                %249 = vst [vmem:[%s241 + $0x3] sm:$0x1] %v248
              $region41: #{tpu_custom_call.1} parent=35 // loop_footer
                %s239 = sadd.s32 1, %s235
              $region42: #{tpu_custom_call.1} parent=35 // loop_footer_branch
                %234 = sbr.rel target = $region38
              $region43: #{tpu_custom_call.1} parent=35 // loop_exit
                _
            $region36: #{tpu_custom_call.1} parent=27 // pred_fallthru
              _
          $region28: #{tpu_custom_call.1} parent=23 // pred_fallthru
            _
          %269 = vnop
        $region24: #{tpu_custom_call.1} parent=15 // pred_fallthru
          _
        // Predicated region
        $region55: #{tpu_custom_call.1} parent=15 // pred_check
          %p270 = pneg %p112
        $region56: #{tpu_custom_call.1} parent=15 // pred_check_branch
          %272 = sbr.rel (%p270) target = $region58
        $region57: #{tpu_custom_call.1} parent=15 // pred_region
          %s273 = smul.u32 4, %s22
          %p274 = scmp.lt.s32.totalorder %s273, 7
          %s275 = scalar_select %p274, %s273, 7
          %s276 = scalar_lea.vmem %s2, %s275
          %s277 = smul.u32 4, %s22
        $region58: #{tpu_custom_call.1} parent=15 // pred_fallthru
          _
      $region16: #{tpu_custom_call.1} parent=5 // pred_fallthru
        _
      %p278 = scmp.le.s32.totalorder 1, %s15
      %p279 = scmp.lt.s32.totalorder %s15, 9
      %p280 = pnand %p278, %p279
      %p281 = pneg %p280
      // Predicated region
      $region59: #{tpu_custom_call.1} parent=5 // pred_check
        _
      $region60: #{tpu_custom_call.1} parent=5 // pred_check_branch
        %283 = sbr.rel (%p280) target = $region62
      $region61: #{tpu_custom_call.1} parent=5 // pred_region
        %s284 = ssub.s32 %s15, 1
        %s285 = sand.u32 %s51, 1
        %s286 = scalar_lea.sflag [#allocation3], %s285
        %s287 = sand.u32 %s51, 1
        %s288 = smul.addr %s287, 256
        %s289 = scalar_lea.vmem [#allocation2], %s288
        // Predicated region
        $region63: #{tpu_custom_call.1} parent=61 // pred_check
          %p290 = pneg %p64
        $region64: #{tpu_custom_call.1} parent=61 // pred_check_branch
          %292 = sbr.rel (%p290) target = $region66
        $region65: #{tpu_custom_call.1} parent=61 // pred_region
          %293 = dma.done %s286, 4096
        $region66: #{tpu_custom_call.1} parent=61 // pred_fallthru
          _
        %s294 = sand.u32 %s79, 1
        %s295 = sand.u32 %s79, 1
        %s296 = smul.addr %s295, 4
        %s297 = scalar_lea.vmem [#allocation5], %s296
        // Predicated region
        $region67: #{tpu_custom_call.1} parent=61 // pred_check
          %p298 = pneg %p92
        $region68: #{tpu_custom_call.1} parent=61 // pred_check_branch
          %300 = sbr.rel (%p298) target = $region70
        $region69: #{tpu_custom_call.1} parent=61 // pred_region
          _
        $region70: #{tpu_custom_call.1} parent=61 // pred_fallthru
          _
        %s301 = sand.u32 %s51, 1
        %s302 = scalar_lea.sflag [#allocation3], %s301
        %s303 = sand.u32 %s51, 1
        %s304 = smul.addr %s303, 256
        %s305 = scalar_lea.vmem [#allocation2], %s304
        %p306 = pneg %p64
        %p307 = pneg %p61
        %s308 = sand.u32 %s79, 1
        %s309 = sand.u32 %s79, 1
        %s310 = smul.addr %s309, 4
        %s311 = scalar_lea.vmem [#allocation5], %s310
        %p312 = pneg %p92
        %p313 = pneg %p89
        %s314 = smul.u32 4, %s25
        %p315 = scmp.lt.s32.totalorder %s314, 7
        %s316 = scalar_select %p315, %s314, 7
        %s317 = scalar_lea.vmem %s2, %s316
        %p318 = pneg %p118
        %p319 = pneg %p115
        %p320 = pneg %p146
        %p321 = pneg %p143
        %s322 = sand.u32 %s133, 1
        %s323 = scalar_lea.sflag [#allocation4], %s322
        %s324 = sand.u32 %s133, 1
        %s325 = smul.addr %s324, 4
        %s326 = scalar_lea.vmem [#allocation6], %s325
        %s327 = smul.u32 4, %s25
        %s328 = smul.u32 16, %s27
        %s329 = smul.u32 4, %s25
        %s330 = smul.u32 4, %s25
        %p331 = scmp.lt.s32.totalorder %s330, 7
        %s332 = scalar_select %p331, %s330, 7
        %s333 = scalar_lea.vmem %s2, %s332
        %s334 = smul.u32 4, %s25
        %s335 = smul.u32 4, %s25
        %v337 = vld [vmem:[%s297] sm:$0x1]
        %v338 = vld [vmem:[%s297 + $0x1] sm:$0x1]
        %v339 = vld [vmem:[%s297 + $0x2] sm:$0x1]
        %v340 = vld [vmem:[%s297 + $0x3] sm:$0x1]
        %v341 = vld [vmem:[%s289] sm:$0xf]
        %v342 = vld [vmem:[%s289 + $0x4] sm:$0xf]
        %v343 = vld [vmem:[%s289 + $0x8] sm:$0xf]
        %v344 = vld [vmem:[%s289 + $0xc] sm:$0xf]
        %v345 = vld [vmem:[%s289 + $0x10] sm:$0xf]
        %v346 = vld [vmem:[%s289 + $0x14] sm:$0xf]
        %v347 = vld [vmem:[%s289 + $0x18] sm:$0xf]
        %v348 = vld [vmem:[%s289 + $0x1c] sm:$0xf]
        %v349 = vld [vmem:[%s289 + $0x20] sm:$0xf]
        %v350 = vld [vmem:[%s289 + $0x24] sm:$0xf]
        %v351 = vld [vmem:[%s289 + $0x28] sm:$0xf]
        %v352 = vld [vmem:[%s289 + $0x2c] sm:$0xf]
        %v353 = vld [vmem:[%s289 + $0x30] sm:$0xf]
        %v354 = vld [vmem:[%s289 + $0x34] sm:$0xf]
        %v355 = vld [vmem:[%s289 + $0x38] sm:$0xf]
        %v356 = vld [vmem:[%s289 + $0x3c] sm:$0xf]
        %v357 = vld [vmem:[%s289 + $0x40] sm:$0xf]
        %v358 = vld [vmem:[%s289 + $0x44] sm:$0xf]
        %v359 = vld [vmem:[%s289 + $0x48] sm:$0xf]
        %v360 = vld [vmem:[%s289 + $0x4c] sm:$0xf]
        %v361 = vld [vmem:[%s289 + $0x50] sm:$0xf]
        %v362 = vld [vmem:[%s289 + $0x54] sm:$0xf]
        %v363 = vld [vmem:[%s289 + $0x58] sm:$0xf]
        %v364 = vld [vmem:[%s289 + $0x5c] sm:$0xf]
        %v365 = vld [vmem:[%s289 + $0x60] sm:$0xf]
        %v366 = vld [vmem:[%s289 + $0x64] sm:$0xf]
        %v367 = vld [vmem:[%s289 + $0x68] sm:$0xf]
        %v368 = vld [vmem:[%s289 + $0x6c] sm:$0xf]
        %v369 = vld [vmem:[%s289 + $0x70] sm:$0xf]
        %v370 = vld [vmem:[%s289 + $0x74] sm:$0xf]
        %v371 = vld [vmem:[%s289 + $0x78] sm:$0xf]
        %v372 = vld [vmem:[%s289 + $0x7c] sm:$0xf]
        %v373 = vld [vmem:[%s289 + $0x80] sm:$0xf]
        %v374 = vld [vmem:[%s289 + $0x84] sm:$0xf]
        %v375 = vld [vmem:[%s289 + $0x88] sm:$0xf]
        %v376 = vld [vmem:[%s289 + $0x8c] sm:$0xf]
        %v377 = vld [vmem:[%s289 + $0x90] sm:$0xf]
        %v378 = vld [vmem:[%s289 + $0x94] sm:$0xf]
        %v379 = vld [vmem:[%s289 + $0x98] sm:$0xf]
        %v380 = vld [vmem:[%s289 + $0x9c] sm:$0xf]
        %v381 = vld [vmem:[%s289 + $0xa0] sm:$0xf]
        %v382 = vld [vmem:[%s289 + $0xa4] sm:$0xf]
        %v383 = vld [vmem:[%s289 + $0xa8] sm:$0xf]
        %v384 = vld [vmem:[%s289 + $0xac] sm:$0xf]
        %v385 = vld [vmem:[%s289 + $0xb0] sm:$0xf]
        %v386 = vld [vmem:[%s289 + $0xb4] sm:$0xf]
        %v387 = vld [vmem:[%s289 + $0xb8] sm:$0xf]
        %v388 = vld [vmem:[%s289 + $0xbc] sm:$0xf]
        %v389 = vld [vmem:[%s289 + $0xc0] sm:$0xf]
        %v390 = vld [vmem:[%s289 + $0xc4] sm:$0xf]
        %v391 = vld [vmem:[%s289 + $0xc8] sm:$0xf]
        %v392 = vld [vmem:[%s289 + $0xcc] sm:$0xf]
        %v393 = vld [vmem:[%s289 + $0xd0] sm:$0xf]
        %v394 = vld [vmem:[%s289 + $0xd4] sm:$0xf]
        %v395 = vld [vmem:[%s289 + $0xd8] sm:$0xf]
        %v396 = vld [vmem:[%s289 + $0xdc] sm:$0xf]
        %v397 = vld [vmem:[%s289 + $0xe0] sm:$0xf]
        %v398 = vld [vmem:[%s289 + $0xe4] sm:$0xf]
        %v399 = vld [vmem:[%s289 + $0xe8] sm:$0xf]
        %v400 = vld [vmem:[%s289 + $0xec] sm:$0xf]
        %v401 = vld [vmem:[%s289 + $0xf0] sm:$0xf]
        %v402 = vld [vmem:[%s289 + $0xf4] sm:$0xf]
        %v403 = vld [vmem:[%s289 + $0xf8] sm:$0xf]
        %v404 = vld [vmem:[%s289 + $0xfc] sm:$0xf]
        %v421 = vunpack.c.l.b16 %v341
        %v422 = vunpack.c.l.b16 %v342
        %v423 = vunpack.c.l.b16 %v343
        %v424 = vunpack.c.l.b16 %v344
        %v425 = vunpack.c.l.b16 %v345
        %v426 = vunpack.c.l.b16 %v346
        %v427 = vunpack.c.l.b16 %v347
        %v428 = vunpack.c.l.b16 %v348
        %v429 = vunpack.c.l.b16 %v349
        %v430 = vunpack.c.l.b16 %v350
        %v431 = vunpack.c.l.b16 %v351
        %v432 = vunpack.c.l.b16 %v352
        %v433 = vunpack.c.l.b16 %v353
        %v434 = vunpack.c.l.b16 %v354
        %v435 = vunpack.c.l.b16 %v355
        %v436 = vunpack.c.l.b16 %v356
        %v437 = vpack.c.b16 %v422, %v421
        %v438 = vpack.c.b16 %v424, %v423
        %v439 = vpack.c.b16 %v426, %v425
        %v440 = vpack.c.b16 %v428, %v427
        %v441 = vpack.c.b16 %v430, %v429
        %v442 = vpack.c.b16 %v432, %v431
        %v443 = vpack.c.b16 %v434, %v433
        %v444 = vpack.c.b16 %v436, %v435
        %453 = vmatprep.subr.bf16.mxu0 0
        %454 = vmatpush1.bf16.msra.mxu0 %v437
        %455 = vmatprep.subr.bf16.mxu0 0
        %456 = vmatpush1.bf16.msra.mxu0 %v438
        %457 = vmatprep.subr.bf16.mxu0 0
        %458 = vmatpush1.bf16.msra.mxu0 %v439
        %459 = vmatprep.subr.bf16.mxu0 0
        %460 = vmatpush1.bf16.msra.mxu0 %v440
        %461 = vmatprep.subr.bf16.mxu0 0
        %462 = vmatpush1.bf16.msra.mxu0 %v441
        %463 = vmatprep.subr.bf16.mxu0 0
        %464 = vmatpush1.bf16.msra.mxu0 %v442
        %465 = vmatprep.subr.bf16.mxu0 0
        %466 = vmatpush1.bf16.msra.mxu0 %v443
        %467 = vmatprep.subr.bf16.mxu0 0
        %468 = vmatpush1.bf16.msra.mxu0 %v444
        %469 = vmatprep.subr.bf16.mxu0 0
        %470 = vmatpush1.bf16.msra.mxu0 0
        %471 = vmatprep.subr.bf16.mxu0 0
        %472 = vmatpush1.bf16.msra.mxu0 0
        %473 = vmatprep.subr.bf16.mxu0 0
        %474 = vmatpush1.bf16.msra.mxu0 0
        %475 = vmatprep.subr.bf16.mxu0 0
        %476 = vmatpush1.bf16.msra.mxu0 0
        %477 = vmatprep.subr.bf16.mxu0 0
        %478 = vmatpush1.bf16.msra.mxu0 0
        %479 = vmatprep.subr.bf16.mxu0 0
        %480 = vmatpush1.bf16.msra.mxu0 0
        %481 = vmatprep.subr.bf16.mxu0 0
        %482 = vmatpush1.bf16.msra.mxu0 0
        %483 = vmatprep.subr.bf16.mxu0 0
        %484 = vmatpush1.bf16.msra.mxu0 0
        %485 = vmatprep.mubr.bf16.mxu0 0
        %486 = vmatmul.mubr.bf16.gmra.mrb[0].mxu0 %v337
        %v487 = vpop.f32.mrb[0].mxu0
        %v488 = vadd.f32 0.0, %v487
        %v489 = vpop.f32.mrb[0].mxu0
        %v490 = vpop.f32.mrb[0].mxu0
        %v491 = vpop.f32.mrb[0].mxu0
        %492 = vdwg.mxu0
        %v509 = vunpack.c.l.b16 %v357
        %v510 = vunpack.c.l.b16 %v358
        %v511 = vunpack.c.l.b16 %v359
        %v512 = vunpack.c.l.b16 %v360
        %v513 = vunpack.c.l.b16 %v361
        %v514 = vunpack.c.l.b16 %v362
        %v515 = vunpack.c.l.b16 %v363
        %v516 = vunpack.c.l.b16 %v364
        %v517 = vunpack.c.l.b16 %v365
        %v518 = vunpack.c.l.b16 %v366
        %v519 = vunpack.c.l.b16 %v367
        %v520 = vunpack.c.l.b16 %v368
        %v521 = vunpack.c.l.b16 %v369
        %v522 = vunpack.c.l.b16 %v370
        %v523 = vunpack.c.l.b16 %v371
        %v524 = vunpack.c.l.b16 %v372
        %v525 = vpack.c.b16 %v510, %v509
        %v526 = vpack.c.b16 %v512, %v511
        %v527 = vpack.c.b16 %v514, %v513
        %v528 = vpack.c.b16 %v516, %v515
        %v529 = vpack.c.b16 %v518, %v517
        %v530 = vpack.c.b16 %v520, %v519
        %v531 = vpack.c.b16 %v522, %v521
        %v532 = vpack.c.b16 %v524, %v523
        %541 = vmatprep.subr.bf16.mxu0 0
        %542 = vmatpush1.bf16.msra.mxu0 %v525
        %543 = vmatprep.subr.bf16.mxu0 0
        %544 = vmatpush1.bf16.msra.mxu0 %v526
        %545 = vmatprep.subr.bf16.mxu0 0
        %546 = vmatpush1.bf16.msra.mxu0 %v527
        %547 = vmatprep.subr.bf16.mxu0 0
        %548 = vmatpush1.bf16.msra.mxu0 %v528
        %549 = vmatprep.subr.bf16.mxu0 0
        %550 = vmatpush1.bf16.msra.mxu0 %v529
        %551 = vmatprep.subr.bf16.mxu0 0
        %552 = vmatpush1.bf16.msra.mxu0 %v530
        %553 = vmatprep.subr.bf16.mxu0 0
        %554 = vmatpush1.bf16.msra.mxu0 %v531
        %555 = vmatprep.subr.bf16.mxu0 0
        %556 = vmatpush1.bf16.msra.mxu0 %v532
        %557 = vmatprep.subr.bf16.mxu0 0
        %558 = vmatpush1.bf16.msra.mxu0 0
        %559 = vmatprep.subr.bf16.mxu0 0
        %560 = vmatpush1.bf16.msra.mxu0 0
        %561 = vmatprep.subr.bf16.mxu0 0
        %562 = vmatpush1.bf16.msra.mxu0 0
        %563 = vmatprep.subr.bf16.mxu0 0
        %564 = vmatpush1.bf16.msra.mxu0 0
        %565 = vmatprep.subr.bf16.mxu0 0
        %566 = vmatpush1.bf16.msra.mxu0 0
        %567 = vmatprep.subr.bf16.mxu0 0
        %568 = vmatpush1.bf16.msra.mxu0 0
        %569 = vmatprep.subr.bf16.mxu0 0
        %570 = vmatpush1.bf16.msra.mxu0 0
        %571 = vmatprep.subr.bf16.mxu0 0
        %572 = vmatpush1.bf16.msra.mxu0 0
        %573 = vmatprep.mubr.bf16.mxu0 0
        %574 = vmatmul.mubr.bf16.gmra.mrb[0].mxu0 %v338
        %v575 = vpop.f32.mrb[0].mxu0
        %v576 = vadd.f32 0.0, %v575
        %v577 = vpop.f32.mrb[0].mxu0
        %v578 = vpop.f32.mrb[0].mxu0
        %v579 = vpop.f32.mrb[0].mxu0
        %580 = vdwg.mxu0
        %v597 = vunpack.c.l.b16 %v373
        %v598 = vunpack.c.l.b16 %v374
        %v599 = vunpack.c.l.b16 %v375
        %v600 = vunpack.c.l.b16 %v376
        %v601 = vunpack.c.l.b16 %v377
        %v602 = vunpack.c.l.b16 %v378
        %v603 = vunpack.c.l.b16 %v379
        %v604 = vunpack.c.l.b16 %v380
        %v605 = vunpack.c.l.b16 %v381
        %v606 = vunpack.c.l.b16 %v382
        %v607 = vunpack.c.l.b16 %v383
        %v608 = vunpack.c.l.b16 %v384
        %v609 = vunpack.c.l.b16 %v385
        %v610 = vunpack.c.l.b16 %v386
        %v611 = vunpack.c.l.b16 %v387
        %v612 = vunpack.c.l.b16 %v388
        %v613 = vpack.c.b16 %v598, %v597
        %v614 = vpack.c.b16 %v600, %v599
        %v615 = vpack.c.b16 %v602, %v601
        %v616 = vpack.c.b16 %v604, %v603
        %v617 = vpack.c.b16 %v606, %v605
        %v618 = vpack.c.b16 %v608, %v607
        %v619 = vpack.c.b16 %v610, %v609
        %v620 = vpack.c.b16 %v612, %v611
        %629 = vmatprep.subr.bf16.mxu0 0
        %630 = vmatpush1.bf16.msra.mxu0 %v613
        %631 = vmatprep.subr.bf16.mxu0 0
        %632 = vmatpush1.bf16.msra.mxu0 %v614
        %633 = vmatprep.subr.bf16.mxu0 0
        %634 = vmatpush1.bf16.msra.mxu0 %v615
        %635 = vmatprep.subr.bf16.mxu0 0
        %636 = vmatpush1.bf16.msra.mxu0 %v616
        %637 = vmatprep.subr.bf16.mxu0 0
        %638 = vmatpush1.bf16.msra.mxu0 %v617
        %639 = vmatprep.subr.bf16.mxu0 0
        %640 = vmatpush1.bf16.msra.mxu0 %v618
        %641 = vmatprep.subr.bf16.mxu0 0
        %642 = vmatpush1.bf16.msra.mxu0 %v619
        %643 = vmatprep.subr.bf16.mxu0 0
        %644 = vmatpush1.bf16.msra.mxu0 %v620
        %645 = vmatprep.subr.bf16.mxu0 0
        %646 = vmatpush1.bf16.msra.mxu0 0
        %647 = vmatprep.subr.bf16.mxu0 0
        %648 = vmatpush1.bf16.msra.mxu0 0
        %649 = vmatprep.subr.bf16.mxu0 0
        %650 = vmatpush1.bf16.msra.mxu0 0
        %651 = vmatprep.subr.bf16.mxu0 0
        %652 = vmatpush1.bf16.msra.mxu0 0
        %653 = vmatprep.subr.bf16.mxu0 0
        %654 = vmatpush1.bf16.msra.mxu0 0
        %655 = vmatprep.subr.bf16.mxu0 0
        %656 = vmatpush1.bf16.msra.mxu0 0
        %657 = vmatprep.subr.bf16.mxu0 0
        %658 = vmatpush1.bf16.msra.mxu0 0
        %659 = vmatprep.subr.bf16.mxu0 0
        %660 = vmatpush1.bf16.msra.mxu0 0
        %661 = vmatprep.mubr.bf16.mxu0 0
        %662 = vmatmul.mubr.bf16.gmra.mrb[0].mxu0 %v339
        %v663 = vpop.f32.mrb[0].mxu0
        %v664 = vadd.f32 0.0, %v663
        %v665 = vpop.f32.mrb[0].mxu0
        %v666 = vpop.f32.mrb[0].mxu0
        %v667 = vpop.f32.mrb[0].mxu0
        %668 = vdwg.mxu0
        %v685 = vunpack.c.l.b16 %v389
        %v686 = vunpack.c.l.b16 %v390
        %v687 = vunpack.c.l.b16 %v391
        %v688 = vunpack.c.l.b16 %v392
        %v689 = vunpack.c.l.b16 %v393
        %v690 = vunpack.c.l.b16 %v394
        %v691 = vunpack.c.l.b16 %v395
        %v692 = vunpack.c.l.b16 %v396
        %v693 = vunpack.c.l.b16 %v397
        %v694 = vunpack.c.l.b16 %v398
        %v695 = vunpack.c.l.b16 %v399
        %v696 = vunpack.c.l.b16 %v400
        %v697 = vunpack.c.l.b16 %v401
        %v698 = vunpack.c.l.b16 %v402
        %v699 = vunpack.c.l.b16 %v403
        %v700 = vunpack.c.l.b16 %v404
        %v701 = vpack.c.b16 %v686, %v685
        %v702 = vpack.c.b16 %v688, %v687
        %v703 = vpack.c.b16 %v690, %v689
        %v704 = vpack.c.b16 %v692, %v691
        %v705 = vpack.c.b16 %v694, %v693
        %v706 = vpack.c.b16 %v696, %v695
        %v707 = vpack.c.b16 %v698, %v697
        %v708 = vpack.c.b16 %v700, %v699
        %717 = vmatprep.subr.bf16.mxu0 0
        %718 = vmatpush1.bf16.msra.mxu0 %v701
        %719 = vmatprep.subr.bf16.mxu0 0
        %720 = vmatpush1.bf16.msra.mxu0 %v702
        %721 = vmatprep.subr.bf16.mxu0 0
        %722 = vmatpush1.bf16.msra.mxu0 %v703
        %723 = vmatprep.subr.bf16.mxu0 0
        %724 = vmatpush1.bf16.msra.mxu0 %v704
        %725 = vmatprep.subr.bf16.mxu0 0
        %726 = vmatpush1.bf16.msra.mxu0 %v705
        %727 = vmatprep.subr.bf16.mxu0 0
        %728 = vmatpush1.bf16.msra.mxu0 %v706
        %729 = vmatprep.subr.bf16.mxu0 0
        %730 = vmatpush1.bf16.msra.mxu0 %v707
        %731 = vmatprep.subr.bf16.mxu0 0
        %732 = vmatpush1.bf16.msra.mxu0 %v708
        %733 = vmatprep.subr.bf16.mxu0 0
        %734 = vmatpush1.bf16.msra.mxu0 0
        %735 = vmatprep.subr.bf16.mxu0 0
        %736 = vmatpush1.bf16.msra.mxu0 0
        %737 = vmatprep.subr.bf16.mxu0 0
        %738 = vmatpush1.bf16.msra.mxu0 0
        %739 = vmatprep.subr.bf16.mxu0 0
        %740 = vmatpush1.bf16.msra.mxu0 0
        %741 = vmatprep.subr.bf16.mxu0 0
        %742 = vmatpush1.bf16.msra.mxu0 0
        %743 = vmatprep.subr.bf16.mxu0 0
        %744 = vmatpush1.bf16.msra.mxu0 0
        %745 = vmatprep.subr.bf16.mxu0 0
        %746 = vmatpush1.bf16.msra.mxu0 0
        %747 = vmatprep.subr.bf16.mxu0 0
        %748 = vmatpush1.bf16.msra.mxu0 0
        %749 = vmatprep.mubr.bf16.mxu0 0
        %750 = vmatmul.mubr.bf16.gmra.mrb[0].mxu0 %v340
        %v751 = vpop.f32.mrb[0].mxu0
        %v752 = vadd.f32 0.0, %v751
        %v753 = vpop.f32.mrb[0].mxu0
        %v754 = vpop.f32.mrb[0].mxu0
        %v755 = vpop.f32.mrb[0].mxu0
        %756 = vdwg.mxu0
        %p757 = scmp.eq.s32.totalorder %s27, 0
        // Predicated region
        $region71: #{tpu_custom_call.1} parent=61 // pred_check
          %p758 = pneg %p757
        $region72: #{tpu_custom_call.1} parent=61 // pred_check_branch
          %760 = sbr.rel (%p758) target = $region74
        $region73: #{tpu_custom_call.1} parent=61 // pred_region
          %761 = vst [vmem:[%s326] sm:$0x1] %v488
          %762 = vst [vmem:[%s326 + $0x1] sm:$0x1] %v576
          %763 = vst [vmem:[%s326 + $0x2] sm:$0x1] %v664
          %764 = vst [vmem:[%s326 + $0x3] sm:$0x1] %v752
        $region74: #{tpu_custom_call.1} parent=61 // pred_fallthru
          _
        %p765 = scmp.ne.s32.totalorder %s27, 0
        // Predicated region
        $region75: #{tpu_custom_call.1} parent=61 // pred_check
          %p766 = pneg %p765
        $region76: #{tpu_custom_call.1} parent=61 // pred_check_branch
          %768 = sbr.rel (%p766) target = $region78
        $region77: #{tpu_custom_call.1} parent=61 // pred_region
          %v769 = vld [vmem:[%s326] sm:$0x1]
          %v770 = vld [vmem:[%s326 + $0x1] sm:$0x1]
          %v771 = vld [vmem:[%s326 + $0x2] sm:$0x1]
          %v772 = vld [vmem:[%s326 + $0x3] sm:$0x1]
          %v773 = vadd.f32 %v769, %v488
          %v774 = vadd.f32 %v770, %v576
          %v775 = vadd.f32 %v771, %v664
          %v776 = vadd.f32 %v772, %v752
          %777 = vst [vmem:[%s326] sm:$0x1] %v773
          %778 = vst [vmem:[%s326 + $0x1] sm:$0x1] %v774
          %779 = vst [vmem:[%s326 + $0x2] sm:$0x1] %v775
          %780 = vst [vmem:[%s326 + $0x3] sm:$0x1] %v776
        $region78: #{tpu_custom_call.1} parent=61 // pred_fallthru
          _
        %p781 = scmp.eq.s32.totalorder %s27, 1
        // Predicated region
        $region79: #{tpu_custom_call.1} parent=61 // pred_check
          %p782 = pneg %p781
        $region80: #{tpu_custom_call.1} parent=61 // pred_check_branch
          %784 = sbr.rel (%p782) target = $region82
        $region81: #{tpu_custom_call.1} parent=61 // pred_region
          %v785 = vld [vmem:[%s326] sm:$0x1]
          %v786 = vld [vmem:[%s326 + $0x1] sm:$0x1]
          %v787 = vld [vmem:[%s326 + $0x2] sm:$0x1]
          %v788 = vld [vmem:[%s326 + $0x3] sm:$0x1]
          %v789 = vld [vmem:[%s333] sm:$0x1]
          %v790 = vld [vmem:[%s333 + $0x1] sm:$0x1]
          %v791 = vld [vmem:[%s333 + $0x2] sm:$0x1]
          %v792 = vld [vmem:[%s333 + $0x3] sm:$0x1]
          %794 = vset.pattern.permute.xlu0 0
          %795 = vperm.xlu0 %794, %v789
          %v796 = vpop.permute.xlu0 %795
          %v798 = vlaneseq
          %v799 = vshrl.u32 %v798, 7
          %v800 = vsub.s32 0, %v799
          %v801 = vrot.slane %v796, %v800
          %803 = vset.pattern.permute.xlu0 0
          %804 = vperm.xlu0 %803, %v790
          %v805 = vpop.permute.xlu0 %804
          %v807 = vlaneseq
          %v808 = vshrl.u32 %v807, 7
          %v809 = vsub.s32 0, %v808
          %v810 = vrot.slane %v805, %v809
          %812 = vset.pattern.permute.xlu0 0
          %813 = vperm.xlu0 %812, %v791
          %v814 = vpop.permute.xlu0 %813
          %v816 = vlaneseq
          %v817 = vshrl.u32 %v816, 7
          %v818 = vsub.s32 0, %v817
          %v819 = vrot.slane %v814, %v818
          %821 = vset.pattern.permute.xlu0 0
          %822 = vperm.xlu0 %821, %v792
          %v823 = vpop.permute.xlu0 %822
          %v825 = vlaneseq
          %v826 = vshrl.u32 %v825, 7
          %v827 = vsub.s32 0, %v826
          %v828 = vrot.slane %v823, %v827
          %v829 = vmul.f32 %v785, %v801
          %v830 = vmul.f32 %v786, %v810
          %v831 = vmul.f32 %v787, %v819
          %v832 = vmul.f32 %v788, %v828
          %833 = vst [vmem:[%s326] sm:$0x1] %v829
          %834 = vst [vmem:[%s326 + $0x1] sm:$0x1] %v830
          %835 = vst [vmem:[%s326 + $0x2] sm:$0x1] %v831
          %836 = vst [vmem:[%s326 + $0x3] sm:$0x1] %v832
        $region82: #{tpu_custom_call.1} parent=61 // pred_fallthru
          _
        %s837 = sand.u32 %s133, 1
        %s838 = scalar_lea.sflag [#allocation4], %s837
        %s839 = sand.u32 %s133, 1
        %s840 = smul.addr %s839, 4
        %s841 = scalar_lea.vmem [#allocation6], %s840
        // Predicated region
        $region83: #{tpu_custom_call.1} parent=61 // pred_check
          %p842 = pneg %p143
        $region84: #{tpu_custom_call.1} parent=61 // pred_check_branch
          %844 = sbr.rel (%p842) target = $region86
        $region85: #{tpu_custom_call.1} parent=61 // pred_region
          %s845 = smul.u32 4, %s25
          %s847 = ssub.s32 64, 64
          %848 = vsyncadd %s838, %s847
          %s849 = smul.addr %s845, 2
          %s850 = sadd.s32 %s26, %s849
          %s851 = smul.addr %s850, 16
          %s852 = scalar_lea.hbm %s3, %s851
          %s853 = sshll.u32 %s841, 4
          %s854 = int_to_ptr.vmem [resolvable:$true] %s853
          %859 = dma.vmem_to_hbm [thread:$0]  %s854, 64, %s852, %s838, 16, 32, 1
        $region86: #{tpu_custom_call.1} parent=61 // pred_fallthru
          _
      $region62: #{tpu_custom_call.1} parent=5 // pred_fallthru
        _
      %p860 = scmp.le.s32.totalorder 2, %s15
      // Predicated region
      $region87: #{tpu_custom_call.1} parent=5 // pred_check
        %p861 = pneg %p860
      $region88: #{tpu_custom_call.1} parent=5 // pred_check_branch
        %863 = sbr.rel (%p861) target = $region90
      $region89: #{tpu_custom_call.1} parent=5 // pred_region
        %s864 = ssub.s32 %s15, 2
        // Predicated region
        $region91: #{tpu_custom_call.1} parent=89 // pred_check
          %p865 = pneg %p149
        $region92: #{tpu_custom_call.1} parent=89 // pred_check_branch
          %867 = sbr.rel (%p865) target = $region94
        $region93: #{tpu_custom_call.1} parent=89 // pred_region
          %s868 = sand.u32 %s134, 1
          %s869 = scalar_lea.sflag [#allocation4], %s868
          %s870 = sand.u32 %s134, 1
          %s871 = smul.addr %s870, 4
          %s872 = scalar_lea.vmem [#allocation6], %s871
          %873 = dma.done %s869, 64
        $region94: #{tpu_custom_call.1} parent=89 // pred_fallthru
          _
      $region90: #{tpu_custom_call.1} parent=5 // pred_fallthru
        _
    $region6: #{tpu_custom_call.1} parent=1 // loop_footer
      %s19 = sadd.s32 1, %s15
    $region7: #{tpu_custom_call.1} parent=1 // loop_footer_branch
      %14 = sbr.rel target = $region3
    $region8: #{tpu_custom_call.1} parent=1 // loop_exit
      _
    %874 = vsyncpa [#allocation3], 1
    %s875 = scalar_lea.sflag [#allocation3], 1
    %876 = vsyncpa %s875, 1
    %877 = vsyncpa [#allocation4], 1
    %s878 = scalar_lea.sflag [#allocation4], 1
    %879 = vsyncpa %s878, 1

</llo_original>
